<compile_context>
chip_gen: v5e
topology: v5e:2x2
jax: 0.10.0
libtpu: 0.0.40
codegen_flags: <defaults>
</compile_context>

<pallas_src>
import jax
import jax.numpy as jnp
from jax.experimental import pallas as pl
from jax.experimental.pallas import tpu as pltpu

EPS = 1e-5


def _round_up(a, b):
    return -(-a // b) * b


def prenorm_linear_kernel(x_ref, avg_ref, w_ref, b_ref, o_ref):
    # x_ref : (TM, LW)   lane-packed rows: PACK original rows (width D) per vreg row
    # avg_ref: (LW, LW)  f32 block-diag of ones(D,D)/D -> per-segment mean via MXU
    # w_ref : (LW, LW)   block-diag affine-folded Linear weight (bf16 or f32)
    # b_ref : (1, LW)    affine-folded Linear bias, tiled across segments (f32)
    x = x_ref[...].astype(jnp.float32)
    avg = avg_ref[...]
    # Segment statistics on the MXU (kernel is HBM-bound -> MXU slack is free).
    # The two reductions are independent: var = E[x^2] - mean^2.
    mean = jnp.dot(x, avg, preferred_element_type=jnp.float32)
    ex2 = jnp.dot(x * x, avg, preferred_element_type=jnp.float32)
    var = jnp.maximum(ex2 - mean * mean, 0.0)
    inv = jax.lax.rsqrt(var + EPS)
    # LN math in f32; cast only the MXU operand of the main matmul to the
    # weight dtype (bf16 on the fast path), accumulate in f32.
    y = ((x - mean) * inv).astype(w_ref.dtype)
    out = jnp.dot(y, w_ref[...], preferred_element_type=jnp.float32)
    o_ref[...] = (out + b_ref[...]).astype(o_ref.dtype)


def prenorm_linear(x, gamma, beta, w, wb, *, row_tile=1024,
                   mxu_dtype=jnp.bfloat16, out_dtype=None):
    """x: (B, N, D) -> (B, N, D), fused LayerNorm(D) + Linear(D, D).

    row_tile is in *packed* rows (each packed row holds 128 // D original rows
    when D divides 128).
    """
    B, N, D = x.shape
    out_dtype = x.dtype if out_dtype is None else out_dtype
    rows = B * N
    row_tile = max(_round_up(row_tile, 8), 8)

    # Fold LayerNorm affine into the Linear (host-side, exact):
    #   ((xn * g + b) @ w + wb) == xn @ (g[:, None] * w) + (b @ w + wb)
    gamma32 = gamma.astype(jnp.float32)
    beta32 = beta.astype(jnp.float32)
    w32 = w.astype(jnp.float32)
    w_folded = gamma32[:, None] * w32                    # (D, D) f32
    wb_folded = beta32 @ w32 + wb.astype(jnp.float32)    # (D,)   f32

    # Lane packing: PACK original rows per 128-lane vreg row.
    PACK = 128 // D if (D <= 128 and 128 % D == 0) else 1
    LW = PACK * D
    eye = jnp.eye(PACK, dtype=jnp.float32)
    w_bd = jnp.kron(eye, w_folded).astype(mxu_dtype)                      # (LW, LW)
    avg = jnp.kron(eye, jnp.full((D, D), 1.0 / D, dtype=jnp.float32))     # (LW, LW)
    bias = jnp.tile(wb_folded.reshape(1, D), (1, PACK))                   # (1, LW)

    # Pack rows: (rows, D) -> (rows_pk, LW). Contiguous reshape = no HBM copy.
    rows_pk = -(-rows // PACK)
    rows_p = rows_pk * PACK
    x2 = x.reshape(rows, D)
    if rows_p != rows:
        # TODO(synk): rows % PACK != 0 needs a (tiny) pad which copies the
        # array; rare for MobileViT token counts.
        x2 = jnp.pad(x2, ((0, rows_p - rows), (0, 0)))
    x2 = x2.reshape(rows_pk, LW)

    # Tile selection: block row-dim must be a multiple of 8 or equal the full
    # extent.  Keep >= 2 grid steps when there is enough work so the parallel
    # axis can shard across v7x's 2 TensorCores.  Partial last block (when
    # rows_pk % tile != 0) is handled by Pallas OOB masking — no pad/slice.
    if rows_pk <= 8:
        tile = rows_pk
    else:
        tile = min(row_tile, _round_up(pl.cdiv(rows_pk, 2), 8))
    grid = (pl.cdiv(rows_pk, tile),)

    out2 = pl.pallas_call(
        prenorm_linear_kernel,
        out_shape=jax.ShapeDtypeStruct((rows_pk, LW), out_dtype),
        grid_spec=pltpu.PrefetchScalarGridSpec(
            num_scalar_prefetch=0,
            grid=grid,
            in_specs=[
                pl.BlockSpec((tile, LW), lambda i: (i, 0)),   # packed x rows
                pl.BlockSpec((LW, LW), lambda i: (0, 0)),     # segment-mean matrix
                pl.BlockSpec((LW, LW), lambda i: (0, 0)),     # block-diag weight
                pl.BlockSpec((1, LW), lambda i: (0, 0)),      # tiled bias
            ],
            out_specs=pl.BlockSpec((tile, LW), lambda i: (i, 0)),
        ),
        compiler_params=pltpu.CompilerParams(
            dimension_semantics=("parallel",)),
    )(x2, avg, w_bd, bias)

    out = out2.reshape(rows_p, D)
    if rows_p != rows:
        out = out[:rows]
    return out.reshape(B, N, D)


def prenorm_linear_ref(x, gamma, beta, w, wb):
    mean = x.mean(-1, keepdims=True)
    var = ((x - mean) ** 2).mean(-1, keepdims=True)
    y = (x - mean) / jnp.sqrt(var + EPS) * gamma + beta
    return y @ w + wb


if __name__ == "__main__":
    key = jax.random.PRNGKey(0)
    B, N, D = 2, 8, 32  # batch, tokens, dim

    kx, kw, kwb, kg, kb = jax.random.split(key, 5)
    x = jax.random.normal(kx, (B, N, D), dtype=jnp.float32)

    # nn.LayerNorm(dim) params — non-trivial so the affine fold is tested.
    gamma = 1.0 + 0.1 * jax.random.normal(kg, (D,), dtype=jnp.float32)
    beta = 0.1 * jax.random.normal(kb, (D,), dtype=jnp.float32)

    # TODO(synk): `fn` is arbitrary in PreNorm; a Linear(dim, dim) stands in
    # for the wrapped Attention/FeedForward block of MobileViT.
    w = jax.random.normal(kw, (D, D), dtype=jnp.float32) * (1.0 / jnp.sqrt(D))
    wb = jax.random.normal(kwb, (D,), dtype=jnp.float32) * 0.01

    ref = prenorm_linear_ref(x, gamma, beta, w, wb)

    # f32-MXU path: tight check of fused LN (segment-stat matmuls), affine
    # fold and block-diagonal packing.
    out_f32 = jax.block_until_ready(
        prenorm_linear(x, gamma, beta, w, wb, mxu_dtype=jnp.float32))
    assert out_f32.shape == (B, N, D)
    assert jnp.allclose(out_f32, ref, atol=2e-4, rtol=2e-4), "f32 mismatch"

    # bf16-MXU path (default fast path on v6e/v7x); looser tolerance is the
    # expected bf16 operand rounding, accumulation stays f32.
    out = jax.block_until_ready(prenorm_linear(x, gamma, beta, w, wb))
    assert out.shape == (B, N, D)
    assert jnp.allclose(out, ref, atol=1e-1, rtol=5e-2), "bf16 mismatch"

    # bf16 output writeback (optional): halves output HBM traffic.
    out_bf = jax.block_until_ready(
        prenorm_linear(x, gamma, beta, w, wb, out_dtype=jnp.bfloat16))
    assert out_bf.dtype == jnp.bfloat16 and out_bf.shape == (B, N, D)
    assert jnp.allclose(out_bf.astype(jnp.float32), ref,
                        atol=2e-1, rtol=1e-1), "bf16-out mismatch"

    print("KERNEL_OK")
</pallas_src>

<mosaic_0001>
module attributes {stable_mosaic.version = 11 : i64} {
  func.func @prenorm_linear_kernel(%arg0: i32, %arg1: memref<4x128xf32, #tpu.memory_space<vmem>>, %arg2: memref<128x128xf32, #tpu.memory_space<vmem>>, %arg3: memref<128x128xf32, #tpu.memory_space<vmem>>, %arg4: memref<1x128xf32, #tpu.memory_space<vmem>>, %arg5: memref<4x128xf32, #tpu.memory_space<vmem>>) attributes {dimension_semantics = [#tpu.dimension_semantics<parallel>], iteration_bounds = array<i64: 1>, scalar_prefetch = 0 : i64, scratch_operands = 0 : i64, tpu.core_type = #tpu.core_type<tc>, window_params = [{transform_indices = @transform_0, window_bounds = array<i64: 4, 128>}, {pipeline_mode = #tpu.pipeline_mode<synchronous>, transform_indices = @transform_1, window_bounds = array<i64: 128, 128>}, {pipeline_mode = #tpu.pipeline_mode<synchronous>, transform_indices = @transform_2, window_bounds = array<i64: 128, 128>}, {pipeline_mode = #tpu.pipeline_mode<synchronous>, transform_indices = @transform_3, window_bounds = array<i64: 1, 128>}, {transform_indices = @transform_4, window_bounds = array<i64: 4, 128>}]} {
    %c0 = arith.constant 0 : index
    %c0_0 = arith.constant 0 : index
    %0 = vector.load %arg1[%c0, %c0_0] : memref<4x128xf32, #tpu.memory_space<vmem>>, vector<4x128xf32>
    %c0_1 = arith.constant 0 : index
    %c0_2 = arith.constant 0 : index
    %1 = vector.load %arg2[%c0_1, %c0_2] : memref<128x128xf32, #tpu.memory_space<vmem>>, vector<128x128xf32>
    %cst = arith.constant dense<0.000000e+00> : vector<4x128xf32>
    %2 = tpu.matmul %0, %1, %cst {dimension_numbers = #tpu.dot_dimension_numbers<[1], [0], [0], [1], [0, 0, 1, 1], [], []>} : vector<4x128xf32>, vector<128x128xf32>, vector<4x128xf32> -> vector<4x128xf32>
    %3 = arith.mulf %0, %0 : vector<4x128xf32>
    %cst_3 = arith.constant dense<0.000000e+00> : vector<4x128xf32>
    %4 = tpu.matmul %3, %1, %cst_3 {dimension_numbers = #tpu.dot_dimension_numbers<[1], [0], [0], [1], [0, 0, 1, 1], [], []>} : vector<4x128xf32>, vector<128x128xf32>, vector<4x128xf32> -> vector<4x128xf32>
    %5 = arith.mulf %2, %2 : vector<4x128xf32>
    %6 = arith.subf %4, %5 : vector<4x128xf32>
    %cst_4 = arith.constant 0.000000e+00 : f32
    %7 = vector.broadcast %cst_4 : f32 to vector<4x128xf32>
    %8 = arith.maximumf %6, %7 : vector<4x128xf32>
    %cst_5 = arith.constant 9.99999974E-6 : f32
    %9 = vector.broadcast %cst_5 : f32 to vector<4x128xf32>
    %10 = arith.addf %8, %9 : vector<4x128xf32>
    %11 = math.rsqrt %10 : vector<4x128xf32>
    %12 = arith.subf %0, %2 : vector<4x128xf32>
    %13 = arith.mulf %12, %11 : vector<4x128xf32>
    %c0_6 = arith.constant 0 : index
    %c0_7 = arith.constant 0 : index
    %14 = vector.load %arg3[%c0_6, %c0_7] : memref<128x128xf32, #tpu.memory_space<vmem>>, vector<128x128xf32>
    %cst_8 = arith.constant dense<0.000000e+00> : vector<4x128xf32>
    %15 = tpu.matmul %13, %14, %cst_8 {dimension_numbers = #tpu.dot_dimension_numbers<[1], [0], [0], [1], [0, 0, 1, 1], [], []>} : vector<4x128xf32>, vector<128x128xf32>, vector<4x128xf32> -> vector<4x128xf32>
    %c0_9 = arith.constant 0 : index
    %c0_10 = arith.constant 0 : index
    %16 = vector.load %arg4[%c0_9, %c0_10] : memref<1x128xf32, #tpu.memory_space<vmem>>, vector<1x128xf32>
    %17 = vector.broadcast %16 : vector<1x128xf32> to vector<4x128xf32>
    %18 = arith.addf %15, %17 : vector<4x128xf32>
    %c0_11 = arith.constant 0 : index
    %c0_12 = arith.constant 0 : index
    %19 = vector.load %arg5[%c0_11, %c0_12] : memref<4x128xf32, #tpu.memory_space<vmem>>, vector<4x128xf32>
    tpu.vector_store %arg5[%c0_11, %c0_12], %18 {strides = array<i32>} : memref<4x128xf32, #tpu.memory_space<vmem>>, vector<4x128xf32>,
    return
  }
  func.func @transform_0(%arg0: i32) -> (i32, i32) {
    %c0_i32 = arith.constant 0 : i32
    %c0_i32_0 = arith.constant 0 : i32
    return %arg0, %c0_i32 : i32, i32
  }
  func.func @transform_1(%arg0: i32) -> (i32, i32) {
    %c0_i32 = arith.constant 0 : i32
    %c0_i32_0 = arith.constant 0 : i32
    %c0_i32_1 = arith.constant 0 : i32
    return %c0_i32, %c0_i32_0 : i32, i32
  }
  func.func @transform_2(%arg0: i32) -> (i32, i32) {
    %c0_i32 = arith.constant 0 : i32
    %c0_i32_0 = arith.constant 0 : i32
    %c0_i32_1 = arith.constant 0 : i32
    return %c0_i32, %c0_i32_0 : i32, i32
  }
  func.func @transform_3(%arg0: i32) -> (i32, i32) {
    %c0_i32 = arith.constant 0 : i32
    %c0_i32_0 = arith.constant 0 : i32
    %c0_i32_1 = arith.constant 0 : i32
    return %c0_i32, %c0_i32_0 : i32, i32
  }
  func.func @transform_4(%arg0: i32) -> (i32, i32) {
    %c0_i32 = arith.constant 0 : i32
    %c0_i32_0 = arith.constant 0 : i32
    return %arg0, %c0_i32 : i32, i32
  }
}

</mosaic_0001>

<llo_original>
// kernel: tpu_custom_call.1
$region0: #{tpu_custom_call.1}
  #allocation0 [shape = 'u32[]', space=smem, size = 0x4, offset = 0x4, fixed_abs, tag = 'smem constant byte address 0x4 - core index']
  #allocation1 [shape = 'u32[72,128]{1,0:T(1,128)}', space=vmem, size = 0x9000, scoped, tag = 'internal scratch']
  %s0 = inlined_call_operand.hbm [shape: f32[4,128], index: 0, kind: input, shape index: {}]
  %s1 = inlined_call_operand.hbm [shape: f32[128,128], index: 1, kind: input, shape index: {}]
  %s2 = inlined_call_operand.hbm [shape: f32[128,128], index: 2, kind: input, shape index: {}]
  %s3 = inlined_call_operand.vmem [shape: f32[1,128], index: 3, kind: input, shape index: {}]
  %s4 = inlined_call_operand.hbm [shape: f32[4,128], index: 4, kind: output, shape index: {}]
  %s5 = sld [smem:[#allocation0]]
  $region38: #{tpu_custom_call.1} parent=0
    _
  %s7 = ssub.s32 1, %s5
  %s8 = scalar_select 0, %s7, %s5
  $region1: #{tpu_custom_call.1} parent=0
    #allocation2 [shape = 'u8[2048]{0}', space=vmem, size = 0x800, scoped, tag = 'input window, operand 0, single buffered']
    #allocation3 [shape = 's32[1]{0}', space=sflag, size = 0x4, scoped, tag = 'scoped memory for tpu_custom_call.1']
    #allocation4 [shape = 's32[1]{0}', space=sflag, size = 0x4, scoped, tag = 'scoped memory for tpu_custom_call.1']
    #allocation5 [shape = 'u8[65536]{0}', space=vmem, size = 0x10000, scoped, tag = 'input window, operand 1, single buffered']
    #allocation6 [shape = 's32[1]{0}', space=sflag, size = 0x4, scoped, tag = 'scoped memory for tpu_custom_call.1']
    #allocation7 [shape = 'u8[65536]{0}', space=vmem, size = 0x10000, scoped, tag = 'input window, operand 2, single buffered']
    #allocation8 [shape = 'u8[2048]{0}', space=vmem, size = 0x800, scoped, tag = 'output window, operand 0, single buffered']
    %9 = vsyncpa [#allocation3], 0
    %10 = vsyncpa [#allocation6], 0
    %11 = vsyncpa [#allocation4], 0
    // Predicated region
    $region2: #{tpu_custom_call.1} parent=1 // pred_check
      _
    $region3: #{tpu_custom_call.1} parent=1 // pred_check_branch
      %13 = sbr.rel (0) target = $region5
    $region4: #{tpu_custom_call.1} parent=1 // pred_region
      %15 = vsyncadd [#allocation3], 0
      %s17 = sshll.u32 %s0, 4
      %s18 = int_to_ptr.hbm [resolvable:$true] %s17
      %s19 = sshll.u32 [#allocation2], 4
      %s20 = int_to_ptr.vmem [resolvable:$true] %s19
      %22 = dma.hbm_to_vmem [thread:$0]  %s18, 64, %s20, [#allocation3]
    $region5: #{tpu_custom_call.1} parent=1 // pred_fallthru
      _
    // Predicated region
    $region6: #{tpu_custom_call.1} parent=1 // pred_check
      _
    $region7: #{tpu_custom_call.1} parent=1 // pred_check_branch
      %24 = sbr.rel (0) target = $region9
    $region8: #{tpu_custom_call.1} parent=1 // pred_region
      %26 = vsyncadd [#allocation6], 0
      %s27 = sshll.u32 %s1, 4
      %s28 = int_to_ptr.hbm [resolvable:$true] %s27
      %s29 = sshll.u32 [#allocation5], 4
      %s30 = int_to_ptr.vmem [resolvable:$true] %s29
      %35 = dma.hbm_to_vmem [thread:$0]  %s28, 2048, %s30, [#allocation6], 128, 128, 8
    $region9: #{tpu_custom_call.1} parent=1 // pred_fallthru
      _
    // Predicated region
    $region10: #{tpu_custom_call.1} parent=1 // pred_check
      _
    $region11: #{tpu_custom_call.1} parent=1 // pred_check_branch
      %37 = sbr.rel (0) target = $region13
    $region12: #{tpu_custom_call.1} parent=1 // pred_region
      %39 = vsyncadd [#allocation6], 0
      %s40 = sshll.u32 %s2, 4
      %s41 = int_to_ptr.hbm [resolvable:$true] %s40
      %s42 = sshll.u32 [#allocation7], 4
      %s43 = int_to_ptr.vmem [resolvable:$true] %s42
      %48 = dma.hbm_to_vmem [thread:$0]  %s41, 2048, %s43, [#allocation6], 128, 128, 8
    $region13: #{tpu_custom_call.1} parent=1 // pred_fallthru
      _
    // Predicated region
    $region14: #{tpu_custom_call.1} parent=1 // pred_check
      _
    $region15: #{tpu_custom_call.1} parent=1 // pred_check_branch
      %50 = sbr.rel (0) target = $region17
    $region16: #{tpu_custom_call.1} parent=1 // pred_region
      _
    $region17: #{tpu_custom_call.1} parent=1 // pred_fallthru
      _
    // Predicated region
    $region18: #{tpu_custom_call.1} parent=1 // pred_check
      _
    $region19: #{tpu_custom_call.1} parent=1 // pred_check_branch
      %52 = sbr.rel (0) target = $region21
    $region20: #{tpu_custom_call.1} parent=1 // pred_region
      %54 = dma.done [#allocation3], 64
    $region21: #{tpu_custom_call.1} parent=1 // pred_fallthru
      _
    // Predicated region
    $region22: #{tpu_custom_call.1} parent=1 // pred_check
      _
    $region23: #{tpu_custom_call.1} parent=1 // pred_check_branch
      %56 = sbr.rel (0) target = $region25
    $region24: #{tpu_custom_call.1} parent=1 // pred_region
      %58 = dma.done [#allocation6], 2048
    $region25: #{tpu_custom_call.1} parent=1 // pred_fallthru
      _
    // Predicated region
    $region26: #{tpu_custom_call.1} parent=1 // pred_check
      _
    $region27: #{tpu_custom_call.1} parent=1 // pred_check_branch
      %60 = sbr.rel (0) target = $region29
    $region28: #{tpu_custom_call.1} parent=1 // pred_region
      %62 = dma.done [#allocation6], 2048
    $region29: #{tpu_custom_call.1} parent=1 // pred_fallthru
      _
    %v63 = vld [vmem:[#allocation2] sm:$0xf]
    %v64 = vld [vmem:[#allocation5] sm:$0xff]
    %v65 = vld [vmem:[#allocation5 + $0x8] sm:$0xff]
    %v66 = vld [vmem:[#allocation5 + $0x10] sm:$0xff]
    %v67 = vld [vmem:[#allocation5 + $0x18] sm:$0xff]
    %v68 = vld [vmem:[#allocation5 + $0x20] sm:$0xff]
    %v69 = vld [vmem:[#allocation5 + $0x28] sm:$0xff]
    %v70 = vld [vmem:[#allocation5 + $0x30] sm:$0xff]
    %v71 = vld [vmem:[#allocation5 + $0x38] sm:$0xff]
    %v72 = vld [vmem:[#allocation5 + $0x40] sm:$0xff]
    %v73 = vld [vmem:[#allocation5 + $0x48] sm:$0xff]
    %v74 = vld [vmem:[#allocation5 + $0x50] sm:$0xff]
    %v75 = vld [vmem:[#allocation5 + $0x58] sm:$0xff]
    %v76 = vld [vmem:[#allocation5 + $0x60] sm:$0xff]
    %v77 = vld [vmem:[#allocation5 + $0x68] sm:$0xff]
    %v78 = vld [vmem:[#allocation5 + $0x70] sm:$0xff]
    %v79 = vld [vmem:[#allocation5 + $0x78] sm:$0xff]
    %80 = vmatpush.msra.mxu0 %v79
    %81 = vmatpush.msra.mxu0 %v78
    %82 = vmatpush.msra.mxu0 %v77
    %83 = vmatpush.msra.mxu0 %v76
    %84 = vmatpush.msra.mxu0 %v75
    %85 = vmatpush.msra.mxu0 %v74
    %86 = vmatpush.msra.mxu0 %v73
    %87 = vmatpush.msra.mxu0 %v72
    %88 = vmatpush.msra.mxu0 %v71
    %89 = vmatpush.msra.mxu0 %v70
    %90 = vmatpush.msra.mxu0 %v69
    %91 = vmatpush.msra.mxu0 %v68
    %92 = vmatpush.msra.mxu0 %v67
    %93 = vmatpush.msra.mxu0 %v66
    %94 = vmatpush.msra.mxu0 %v65
    %95 = vmatpush.msra.mxu0 %v64
    %96 = vmatmul.f32.gmra.mxu0 %v63
    %v97 = vpop.f32.mrf.mxu0
    %v98 = vadd.f32 0.0, %v97
    %99 = vdwg.mxu0
    %v100 = vmul.f32 %v63, %v63
    %101 = vmatpush.msra.mxu0 %v79
    %102 = vmatpush.msra.mxu0 %v78
    %103 = vmatpush.msra.mxu0 %v77
    %104 = vmatpush.msra.mxu0 %v76
    %105 = vmatpush.msra.mxu0 %v75
    %106 = vmatpush.msra.mxu0 %v74
    %107 = vmatpush.msra.mxu0 %v73
    %108 = vmatpush.msra.mxu0 %v72
    %109 = vmatpush.msra.mxu0 %v71
    %110 = vmatpush.msra.mxu0 %v70
    %111 = vmatpush.msra.mxu0 %v69
    %112 = vmatpush.msra.mxu0 %v68
    %113 = vmatpush.msra.mxu0 %v67
    %114 = vmatpush.msra.mxu0 %v66
    %115 = vmatpush.msra.mxu0 %v65
    %116 = vmatpush.msra.mxu0 %v64
    %117 = vmatmul.f32.gmra.mxu0 %v100
    %v118 = vpop.f32.mrf.mxu0
    %v119 = vadd.f32 0.0, %v118
    %120 = vdwg.mxu0
    %v121 = vmul.f32 %v98, %v98
    %v122 = vsub.f32 %v119, %v121
    %v123 = vmax.f32 %v122, 0.0
    %v124 = vadd.f32 %v123, 1e-05
    %v125 = vrsqrt.pop %v124
    %v126 = vmul.f32 %v125, %v124
    %v127 = vmul.f32 %v126, %v125
    %v128 = vmul.f32 0.5, %v127
    %v129 = vsub.f32 1.5, %v128
    %v130 = vmul.f32 %v125, %v129
    %vm131 = vweird.f32 %v124
    %vm132 = vweird.f32 %v125
    %vm133 = vmor %vm131, %vm132
    %v134 = vsel %vm133, %v125, %v130
    %v135 = vsub.f32 %v63, %v98
    %v136 = vmul.f32 %v135, %v134
    %v137 = vld [vmem:[#allocation7] sm:$0xff]
    %v138 = vld [vmem:[#allocation7 + $0x8] sm:$0xff]
    %v139 = vld [vmem:[#allocation7 + $0x10] sm:$0xff]
    %v140 = vld [vmem:[#allocation7 + $0x18] sm:$0xff]
    %v141 = vld [vmem:[#allocation7 + $0x20] sm:$0xff]
    %v142 = vld [vmem:[#allocation7 + $0x28] sm:$0xff]
    %v143 = vld [vmem:[#allocation7 + $0x30] sm:$0xff]
    %v144 = vld [vmem:[#allocation7 + $0x38] sm:$0xff]
    %v145 = vld [vmem:[#allocation7 + $0x40] sm:$0xff]
    %v146 = vld [vmem:[#allocation7 + $0x48] sm:$0xff]
    %v147 = vld [vmem:[#allocation7 + $0x50] sm:$0xff]
    %v148 = vld [vmem:[#allocation7 + $0x58] sm:$0xff]
    %v149 = vld [vmem:[#allocation7 + $0x60] sm:$0xff]
    %v150 = vld [vmem:[#allocation7 + $0x68] sm:$0xff]
    %v151 = vld [vmem:[#allocation7 + $0x70] sm:$0xff]
    %v152 = vld [vmem:[#allocation7 + $0x78] sm:$0xff]
    %v153 = vld [vmem:[%s3] sm:$0x1]
    %v155 = vperm.slane %v153, 0
    %157 = vmatpush.msra.mxu0 %v152
    %158 = vmatpush.msra.mxu0 %v151
    %159 = vmatpush.msra.mxu0 %v150
    %160 = vmatpush.msra.mxu0 %v149
    %161 = vmatpush.msra.mxu0 %v148
    %162 = vmatpush.msra.mxu0 %v147
    %163 = vmatpush.msra.mxu0 %v146
    %164 = vmatpush.msra.mxu0 %v145
    %165 = vmatpush.msra.mxu0 %v144
    %166 = vmatpush.msra.mxu0 %v143
    %167 = vmatpush.msra.mxu0 %v142
    %168 = vmatpush.msra.mxu0 %v141
    %169 = vmatpush.msra.mxu0 %v140
    %170 = vmatpush.msra.mxu0 %v139
    %171 = vmatpush.msra.mxu0 %v138
    %172 = vmatpush.msra.mxu0 %v137
    %173 = vmatmul.f32.gmra.mxu0 %v136
    %v174 = vpop.f32.mrf.mxu0
    %v175 = vadd.f32 %v155, %v174
    %176 = vdwg.mxu0
    %177 = vst [vmem:[#allocation8] sm:$0xf] %v175
    // Predicated region
    $region30: #{tpu_custom_call.1} parent=1 // pred_check
      _
    $region31: #{tpu_custom_call.1} parent=1 // pred_check_branch
      %179 = sbr.rel (0) target = $region33
    $region32: #{tpu_custom_call.1} parent=1 // pred_region
      %181 = vsyncadd [#allocation4], 0
      %s183 = sshll.u32 [#allocation8], 4
      %s184 = int_to_ptr.vmem [resolvable:$true] %s183
      %s185 = sshll.u32 %s4, 4
      %s186 = int_to_ptr.hbm [resolvable:$true] %s185
      %188 = dma.vmem_to_hbm [thread:$0]  %s184, 64, %s186, [#allocation4]
    $region33: #{tpu_custom_call.1} parent=1 // pred_fallthru
      _
    // Predicated region
    $region34: #{tpu_custom_call.1} parent=1 // pred_check
      _
    $region35: #{tpu_custom_call.1} parent=1 // pred_check_branch
      %190 = sbr.rel (0) target = $region37
    $region36: #{tpu_custom_call.1} parent=1 // pred_region
      %192 = dma.done [#allocation4], 64
    $region37: #{tpu_custom_call.1} parent=1 // pred_fallthru
      _
    %193 = vsyncpa [#allocation3], 1
    %194 = vsyncpa [#allocation6], 1
    %195 = vsyncpa [#allocation4], 1

</llo_original>
